<compile_context>
chip_gen: v7x
topology: tpu7x:2x2x1
jax: 0.10.0
libtpu: 0.0.40
codegen_flags: <defaults>
</compile_context>

<pallas_src>
import jax
import jax.numpy as jnp
import numpy as np
from jax import lax
from jax.experimental import pallas as pl
from jax.experimental.pallas import tpu as pltpu

NUM_VERTS = 778
V_PAD = ((NUM_VERTS + 127) // 128) * 128          # 896  (7 * 128, lane aligned)
NV3 = NUM_VERTS * 3                               # 2334 (torch flatten length)
K_PAD = 3 * V_PAD                                 # 2688 (21 * 128, lane aligned)
OUT_DIM = 3 * 3 + 2 + 1                           # 12


# ----------------------------- Pallas kernels ------------------------------ #

def mlp_kernel(feat_ref, verts_ref, w1_ref, b12_ref, w2a_ref, w2b_ref,
               w3_ref, b3_ref, out_ref):
    # h1 = relu(features @ W1 + b1)
    feat = feat_ref[...]                                        # (B, F)
    h1 = jnp.dot(feat, w1_ref[...],
                 preferred_element_type=jnp.float32) + b12_ref[0:1, :]
    h1 = jnp.maximum(h1, 0.0)

    # h2 = relu([verts | h1] @ W2 + b2)  -- concat folded into split weights.
    # verts_ref: (B, K_PAD) lane-dense, w2a_ref: (F, K_PAD) lane-dense;
    # contract the last dims (A @ B^T) so both operands stream unmasked.
    h2 = lax.dot_general(verts_ref[...], w2a_ref[...],
                         (((1,), (1,)), ((), ())),
                         preferred_element_type=jnp.float32)
    h2 = (h2
          + jnp.dot(h1, w2b_ref[...], preferred_element_type=jnp.float32)
          + b12_ref[1:2, :])
    h2 = jnp.maximum(h2, 0.0)

    # out = h2 @ W3 + b3
    out_ref[...] = (jnp.dot(h2, w3_ref[...],
                            preferred_element_type=jnp.float32) + b3_ref[...])


def apply_kernel(rs_ref, sh_ref, v_ref, o_ref):
    # rs_ref : (B, 9) f32 SMEM   row-major Rs = R * (sum(s) * scale)
    # sh_ref : (B, 2) f32 SMEM   [shift_u, shift_v]
    # v_ref  : (B, 3, V_PAD) lane-dense verts (x-row, y-row, z-row)
    # o_ref  : (B, 3, V_PAD) lane-dense output
    # Monolithic: statically unrolled over the (tiny) batch.
    B = v_ref.shape[0]
    for b in range(B):
        v0 = v_ref[b, 0:1, :]                      # (1, V_PAD)
        v1 = v_ref[b, 1:2, :]
        v2 = v_ref[b, 2:3, :]

        def rs(k, _b=b):                           # scalar from SMEM
            return rs_ref[_b, k]

        # out_T[j, :] = sum_i Rs[i, j] * v_T[i, :]  (+ shift for j in {0, 1})
        # Direct row stores (no sublane concatenate).
        o_ref[b, 0:1, :] = rs(0) * v0 + rs(3) * v1 + rs(6) * v2 + sh_ref[b, 0]
        o_ref[b, 1:2, :] = rs(1) * v0 + rs(4) * v1 + rs(7) * v2 + sh_ref[b, 1]
        o_ref[b, 2:3, :] = rs(2) * v0 + rs(5) * v1 + rs(8) * v2


# ------------------------------- wrappers ---------------------------------- #

def mlp_call(feat, verts_flat, w1t, b12, w2a, w2bt, w3t, b3):
    # Monolithic (no grid) at tiny B: whole problem (<400 KB) fits in VMEM.
    # TODO(synk): for large B on v7x, add a B-blocked "parallel" grid with
    # constant-index weight specs so each TC keeps W resident.
    B = feat.shape[0]
    return pl.pallas_call(
        mlp_kernel,
        out_shape=jax.ShapeDtypeStruct((B, OUT_DIM), jnp.float32),
    )(feat, verts_flat, w1t, b12, w2a, w2bt, w3t, b3)


def apply_call(rs9, shift, verts_tp):
    B = verts_tp.shape[0]
    return pl.pallas_call(
        apply_kernel,
        out_shape=jax.ShapeDtypeStruct((B, 3, V_PAD), jnp.float32),
        in_specs=[
            pl.BlockSpec(memory_space=pltpu.MemorySpace.SMEM),   # Rs scalars
            pl.BlockSpec(memory_space=pltpu.MemorySpace.SMEM),   # shift scalars
            pl.BlockSpec(memory_space=pltpu.MemorySpace.VMEM),   # verts
        ],
        out_specs=pl.BlockSpec(memory_space=pltpu.MemorySpace.VMEM),
    )(rs9, shift, verts_tp)


def prepare_params(params, in_features):
    """One-time (offline) weight prep: transpose, split at the concat boundary,
    permute the verts block to the lane-dense (3, V_PAD) flatten order.  All
    large operands end up lane-dense with 128-aligned last dims."""
    W1, b1, W2, b2, W3, b3 = params
    F = in_features

    w1t = W1.T                                                  # (F, F)

    # W2 columns [:NV3] are indexed by torch flatten 3*v + c.  Reorder to the
    # lane-dense c*V_PAD + v order and zero-pad the vertex axis to 896.
    w2a = W2[:, :NV3].reshape(F, NUM_VERTS, 3)                  # (F, V, 3)
    w2a = jnp.transpose(w2a, (0, 2, 1))                         # (F, 3, V)
    w2a = jnp.pad(w2a, ((0, 0), (0, 0), (0, V_PAD - NUM_VERTS)))
    w2a = w2a.reshape(F, K_PAD)                                 # (F, 2688) lane-dense

    w2bt = W2[:, NV3:].T                                        # (F, F)
    w3t = W3.T                                                  # (F, 12)

    b12 = jnp.stack([b1, b2], axis=0)                           # (2, F) packed
    b3r = b3.reshape(1, OUT_DIM)
    return (w1t, b12, w2a, w2bt, w3t, b3r)


def global_transformer_forward(batched_verts, features, prepared):
    """Pallas-backed forward matching GlobalTransformer.forward."""
    w1t, b12, w2a, w2bt, w3t, b3 = prepared
    B = batched_verts.shape[0]

    # Layout plumbing: one lane-dense, lane-padded verts buffer shared by both
    # kernels ((B,3,896) for apply, free reshape to (B,2688) for the MLP).
    # TODO(synk): if the caller can supply/accept the (B, 3, V_PAD) layout,
    # both boundary transposes (and the pad/slice) disappear.
    verts_t = jnp.transpose(batched_verts, (0, 2, 1))            # (B, 3, V)
    verts_tp = jnp.pad(verts_t, ((0, 0), (0, 0), (0, V_PAD - NUM_VERTS)))
    verts_flat = verts_tp.reshape(B, K_PAD)                      # c*V_PAD + v order

    transforms = mlp_call(features, verts_flat,
                          w1t, b12, w2a, w2bt, w3t, b3)          # (B, 12)

    svdM = transforms[:, :9].reshape(B, 3, 3)
    shift = transforms[:, 9:11]                                  # (B, 2)
    scale = transforms[:, 11]                                    # (B,)

    # orthogonal_procrustes on tiny (B,3,3) matrices.
    # TODO(synk): 3x3 SVD stays in XLA (jnp.linalg.svd); a fused in-kernel
    # Newton-Schulz polar iteration would remove launches but is accuracy-gated.
    u, s, vh = jnp.linalg.svd(svdM)
    R = jnp.matmul(u, vh)                                        # u @ v^T
    coef = (jnp.sum(s, axis=1) * scale)[:, None, None]           # (B, 1, 1)
    rs9 = (R * coef).reshape(B, 9)                               # fold coef into R

    out_tp = apply_call(rs9, shift, verts_tp)                    # (B, 3, V_PAD)
    return jnp.transpose(out_tp[:, :, :NUM_VERTS], (0, 2, 1))    # (B, V, 3)


# plain-JAX reference (mirrors the PyTorch module exactly)
def reference_forward(batched_verts, features, params):
    W1, b1, W2, b2, W3, b3 = params
    B = batched_verts.shape[0]
    f = jax.nn.relu(features @ W1.T + b1)
    cat = jnp.concatenate([batched_verts.reshape(B, -1), f], axis=1)
    t = jax.nn.relu(cat @ W2.T + b2) @ W3.T + b3
    svdM = t[:, :9].reshape(B, 3, 3)
    shift = t[:, 9:11].reshape(B, 1, 2)
    scale = t[:, 11].reshape(B, 1, 1)
    u, s, vh = jnp.linalg.svd(svdM)
    R = jnp.matmul(u, vh)
    uvds = (batched_verts @ R) * jnp.sum(s, axis=1).reshape(B, 1, 1) * scale
    uvds = uvds.at[:, :, :2].add(shift)
    return uvds


# --------------------------------- main ------------------------------------ #

if __name__ == "__main__":
    B, F = 2, 32

    key = jax.random.PRNGKey(0)
    kv, kf, k1, k2, k3, k4, k5, k6 = jax.random.split(key, 8)

    batched_verts = jax.random.normal(kv, (B, NUM_VERTS, 3), jnp.float32)
    features = jax.random.normal(kf, (B, F), jnp.float32)

    # deterministic Linear params (PyTorch-style uniform bounds)
    def lin(kw, kb, out_f, in_f):
        bound = 1.0 / np.sqrt(in_f)
        W = jax.random.uniform(kw, (out_f, in_f), jnp.float32, -bound, bound)
        b = jax.random.uniform(kb, (out_f,), jnp.float32, -bound, bound)
        return W, b

    W1, b1 = lin(k1, k2, F, F)                   # refeature
    W2, b2 = lin(k3, k4, F, F + NV3)             # transformer[0]
    W3, b3 = lin(k5, k6, OUT_DIM, F)             # transformer[2]
    params = (W1, b1, W2, b2, W3, b3)

    # one-time weight prep (done once at load time, not per forward)
    prepared = jax.block_until_ready(prepare_params(params, F))

    out = global_transformer_forward(batched_verts, features, prepared)
    out = jax.block_until_ready(out)

    ref = jax.block_until_ready(reference_forward(batched_verts, features, params))

    assert out.shape == (B, NUM_VERTS, 3), out.shape
    # slightly looser than 1e-4: MXU accumulation order differs (permuted /
    # padded K) and the 3x3 SVD amplifies ~1e-6 perturbations of its input.
    np.testing.assert_allclose(np.asarray(out), np.asarray(ref),
                               rtol=1e-3, atol=1e-3)
    print("KERNEL_OK")
</pallas_src>

<mosaic_0001>
module attributes {stable_mosaic.version = 11 : i64} {
  func.func @mlp_kernel(%arg0: memref<2x32xf32, #tpu.memory_space<vmem>>, %arg1: memref<2x2688xf32, #tpu.memory_space<vmem>>, %arg2: memref<32x32xf32, #tpu.memory_space<vmem>>, %arg3: memref<2x32xf32, #tpu.memory_space<vmem>>, %arg4: memref<32x2688xf32, #tpu.memory_space<vmem>>, %arg5: memref<32x32xf32, #tpu.memory_space<vmem>>, %arg6: memref<32x12xf32, #tpu.memory_space<vmem>>, %arg7: memref<1x12xf32, #tpu.memory_space<vmem>>, %arg8: memref<2x12xf32, #tpu.memory_space<vmem>>) attributes {dimension_semantics = [], scalar_prefetch = 0 : i64, scratch_operands = 0 : i64, tpu.core_type = #tpu.core_type<tc>} {
    %c0 = arith.constant 0 : index
    %c0_0 = arith.constant 0 : index
    %0 = vector.load %arg0[%c0, %c0_0] : memref<2x32xf32, #tpu.memory_space<vmem>>, vector<2x32xf32>
    %c0_1 = arith.constant 0 : index
    %c0_2 = arith.constant 0 : index
    %1 = vector.load %arg2[%c0_1, %c0_2] : memref<32x32xf32, #tpu.memory_space<vmem>>, vector<32x32xf32>
    %cst = arith.constant dense<0.000000e+00> : vector<2x32xf32>
    %2 = tpu.matmul %0, %1, %cst {dimension_numbers = #tpu.dot_dimension_numbers<[1], [0], [0], [1], [0, 0, 1, 1], [], []>} : vector<2x32xf32>, vector<32x32xf32>, vector<2x32xf32> -> vector<2x32xf32>
    %c0_3 = arith.constant 0 : index
    %c0_4 = arith.constant 0 : index
    %3 = vector.load %arg3[%c0_3, %c0_4] : memref<2x32xf32, #tpu.memory_space<vmem>>, vector<1x32xf32>
    %4 = vector.broadcast %3 : vector<1x32xf32> to vector<2x32xf32>
    %5 = arith.addf %2, %4 : vector<2x32xf32>
    %cst_5 = arith.constant 0.000000e+00 : f32
    %6 = vector.broadcast %cst_5 : f32 to vector<2x32xf32>
    %7 = arith.maximumf %5, %6 : vector<2x32xf32>
    %c0_6 = arith.constant 0 : index
    %c0_7 = arith.constant 0 : index
    %8 = vector.load %arg1[%c0_6, %c0_7] : memref<2x2688xf32, #tpu.memory_space<vmem>>, vector<2x2688xf32>
    %c0_8 = arith.constant 0 : index
    %c0_9 = arith.constant 0 : index
    %9 = vector.load %arg4[%c0_8, %c0_9] : memref<32x2688xf32, #tpu.memory_space<vmem>>, vector<32x2688xf32>
    %cst_10 = arith.constant dense<0.000000e+00> : vector<2x32xf32>
    %10 = tpu.matmul %8, %9, %cst_10 {dimension_numbers = #tpu.dot_dimension_numbers<[1], [1], [0], [0], [0, 0, 1, 0], [], []>} : vector<2x2688xf32>, vector<32x2688xf32>, vector<2x32xf32> -> vector<2x32xf32>
    %c0_11 = arith.constant 0 : index
    %c0_12 = arith.constant 0 : index
    %11 = vector.load %arg5[%c0_11, %c0_12] : memref<32x32xf32, #tpu.memory_space<vmem>>, vector<32x32xf32>
    %cst_13 = arith.constant dense<0.000000e+00> : vector<2x32xf32>
    %12 = tpu.matmul %7, %11, %cst_13 {dimension_numbers = #tpu.dot_dimension_numbers<[1], [0], [0], [1], [0, 0, 1, 1], [], []>} : vector<2x32xf32>, vector<32x32xf32>, vector<2x32xf32> -> vector<2x32xf32>
    %13 = arith.addf %10, %12 : vector<2x32xf32>
    %c1 = arith.constant 1 : index
    %c0_14 = arith.constant 0 : index
    %14 = vector.load %arg3[%c1, %c0_14] : memref<2x32xf32, #tpu.memory_space<vmem>>, vector<1x32xf32>
    %15 = vector.broadcast %14 : vector<1x32xf32> to vector<2x32xf32>
    %16 = arith.addf %13, %15 : vector<2x32xf32>
    %cst_15 = arith.constant 0.000000e+00 : f32
    %17 = vector.broadcast %cst_15 : f32 to vector<2x32xf32>
    %18 = arith.maximumf %16, %17 : vector<2x32xf32>
    %c0_16 = arith.constant 0 : index
    %c0_17 = arith.constant 0 : index
    %19 = vector.load %arg6[%c0_16, %c0_17] : memref<32x12xf32, #tpu.memory_space<vmem>>, vector<32x12xf32>
    %cst_18 = arith.constant dense<0.000000e+00> : vector<2x12xf32>
    %20 = tpu.matmul %18, %19, %cst_18 {dimension_numbers = #tpu.dot_dimension_numbers<[1], [0], [0], [1], [0, 0, 1, 1], [], []>} : vector<2x32xf32>, vector<32x12xf32>, vector<2x12xf32> -> vector<2x12xf32>
    %c0_19 = arith.constant 0 : index
    %c0_20 = arith.constant 0 : index
    %21 = vector.load %arg7[%c0_19, %c0_20] : memref<1x12xf32, #tpu.memory_space<vmem>>, vector<1x12xf32>
    %22 = vector.broadcast %21 : vector<1x12xf32> to vector<2x12xf32>
    %23 = arith.addf %20, %22 : vector<2x12xf32>
    %c0_21 = arith.constant 0 : index
    %c0_22 = arith.constant 0 : index
    %24 = vector.load %arg8[%c0_21, %c0_22] : memref<2x12xf32, #tpu.memory_space<vmem>>, vector<2x12xf32>
    tpu.vector_store %arg8[%c0_21, %c0_22], %23 {strides = array<i32>} : memref<2x12xf32, #tpu.memory_space<vmem>>, vector<2x12xf32>,
    return
  }
}

</mosaic_0001>

<llo_original>
// kernel: tpu_custom_call.1
$region0: #{tpu_custom_call.1}
  #allocation0 [shape = 'u32[]', space=smem, size = 0x4, offset = 0x4, fixed_abs, tag = 'smem constant byte address 0x4 - core index']
  #allocation1 [shape = 'u32[144,128]{1,0:T(1,128)}', space=vmem, size = 0x12000, scoped, tag = 'internal scratch']
  %s0 = inlined_call_operand.vmem [shape: f32[2,32], index: 0, kind: input, shape index: {}]
  %s1 = inlined_call_operand.vmem [shape: f32[2,2688], index: 1, kind: input, shape index: {}]
  %s2 = inlined_call_operand.hbm [shape: f32[32,32], index: 2, kind: input, shape index: {}]
  %s3 = inlined_call_operand.vmem [shape: f32[2,32], index: 3, kind: input, shape index: {}]
  %s4 = inlined_call_operand.hbm [shape: f32[32,2688], index: 4, kind: input, shape index: {}]
  %s5 = inlined_call_operand.hbm [shape: f32[32,32], index: 5, kind: input, shape index: {}]
  %s6 = inlined_call_operand.vmem [shape: f32[32,12], index: 6, kind: input, shape index: {}]
  %s7 = inlined_call_operand.vmem [shape: f32[1,12], index: 7, kind: input, shape index: {}]
  %s8 = inlined_call_operand.hbm [shape: f32[2,12], index: 8, kind: output, shape index: {}]
  %s9 = sld [smem:[#allocation0]]
  $region54: #{tpu_custom_call.1} parent=0
    _
  %s11 = ssub.s32 1, %s9
  %s12 = scalar_select 0, %s11, %s9
  $region1: #{tpu_custom_call.1} parent=0
    #allocation2 [shape = 'u8[16384]{0}', space=vmem, size = 0x4000, scoped, tag = 'input window, operand 2, single buffered']
    #allocation3 [shape = 's32[1]{0}', space=sflag, size = 0x4, scoped, tag = 'scoped memory for tpu_custom_call.1']
    #allocation4 [shape = 's32[1]{0}', space=sflag, size = 0x4, scoped, tag = 'scoped memory for tpu_custom_call.1']
    #allocation5 [shape = 'u8[344064]{0}', space=vmem, size = 0x54000, scoped, tag = 'input window, operand 4, single buffered']
    #allocation6 [shape = 's32[1]{0}', space=sflag, size = 0x4, scoped, tag = 'scoped memory for tpu_custom_call.1']
    #allocation7 [shape = 'u8[16384]{0}', space=vmem, size = 0x4000, scoped, tag = 'input window, operand 5, single buffered']
    #allocation8 [shape = 'u8[1024]{0}', space=vmem, size = 0x400, scoped, tag = 'output window, operand 0, single buffered']
    %13 = vsyncpa [#allocation3], 0
    %14 = vsyncpa [#allocation6], 0
    %15 = vsyncpa [#allocation4], 0
    // Predicated region
    $region2: #{tpu_custom_call.1} parent=1 // pred_check
      _
    $region3: #{tpu_custom_call.1} parent=1 // pred_check_branch
      %17 = sbr.rel (0) target = $region5
    $region4: #{tpu_custom_call.1} parent=1 // pred_region
      _
    $region5: #{tpu_custom_call.1} parent=1 // pred_fallthru
      _
    // Predicated region
    $region6: #{tpu_custom_call.1} parent=1 // pred_check
      _
    $region7: #{tpu_custom_call.1} parent=1 // pred_check_branch
      %19 = sbr.rel (0) target = $region9
    $region8: #{tpu_custom_call.1} parent=1 // pred_region
      _
    $region9: #{tpu_custom_call.1} parent=1 // pred_fallthru
      _
    // Predicated region
    $region10: #{tpu_custom_call.1} parent=1 // pred_check
      _
    $region11: #{tpu_custom_call.1} parent=1 // pred_check_branch
      %21 = sbr.rel (0) target = $region13
    $region12: #{tpu_custom_call.1} parent=1 // pred_region
      %s23 = ssub.s32 512, 512
      %24 = vsyncadd [#allocation3], %s23
      %s25 = sshll.u32 [#allocation2], 4
      %s26 = int_to_ptr.vmem [resolvable:$true] %s25
      %31 = dma.hbm_to_vmem [thread:$0]  %s2, 512, %s26, [#allocation3], 128, 128, 8
    $region13: #{tpu_custom_call.1} parent=1 // pred_fallthru
      _
    // Predicated region
    $region14: #{tpu_custom_call.1} parent=1 // pred_check
      _
    $region15: #{tpu_custom_call.1} parent=1 // pred_check_branch
      %33 = sbr.rel (0) target = $region17
    $region16: #{tpu_custom_call.1} parent=1 // pred_region
      _
    $region17: #{tpu_custom_call.1} parent=1 // pred_fallthru
      _
    // Predicated region
    $region18: #{tpu_custom_call.1} parent=1 // pred_check
      _
    $region19: #{tpu_custom_call.1} parent=1 // pred_check_branch
      %35 = sbr.rel (0) target = $region21
    $region20: #{tpu_custom_call.1} parent=1 // pred_region
      %s37 = ssub.s32 10752, 10752
      %38 = vsyncadd [#allocation6], %s37
      %s39 = sshll.u32 [#allocation5], 4
      %s40 = int_to_ptr.vmem [resolvable:$true] %s39
      %45 = dma.hbm_to_vmem [thread:$0]  %s4, 10752, %s40, [#allocation6], 2688, 2688, 168
    $region21: #{tpu_custom_call.1} parent=1 // pred_fallthru
      _
    // Predicated region
    $region22: #{tpu_custom_call.1} parent=1 // pred_check
      _
    $region23: #{tpu_custom_call.1} parent=1 // pred_check_branch
      %47 = sbr.rel (0) target = $region25
    $region24: #{tpu_custom_call.1} parent=1 // pred_region
      %s49 = ssub.s32 512, 512
      %50 = vsyncadd [#allocation6], %s49
      %s51 = sshll.u32 [#allocation7], 4
      %s52 = int_to_ptr.vmem [resolvable:$true] %s51
      %57 = dma.hbm_to_vmem [thread:$0]  %s5, 512, %s52, [#allocation6], 128, 128, 8
    $region25: #{tpu_custom_call.1} parent=1 // pred_fallthru
      _
    // Predicated region
    $region26: #{tpu_custom_call.1} parent=1 // pred_check
      _
    $region27: #{tpu_custom_call.1} parent=1 // pred_check_branch
      %59 = sbr.rel (0) target = $region29
    $region28: #{tpu_custom_call.1} parent=1 // pred_region
      _
    $region29: #{tpu_custom_call.1} parent=1 // pred_fallthru
      _
    // Predicated region
    $region30: #{tpu_custom_call.1} parent=1 // pred_check
      _
    $region31: #{tpu_custom_call.1} parent=1 // pred_check_branch
      %61 = sbr.rel (0) target = $region33
    $region32: #{tpu_custom_call.1} parent=1 // pred_region
      _
    $region33: #{tpu_custom_call.1} parent=1 // pred_fallthru
      _
    // Predicated region
    $region34: #{tpu_custom_call.1} parent=1 // pred_check
      _
    $region35: #{tpu_custom_call.1} parent=1 // pred_check_branch
      %63 = sbr.rel (0) target = $region37
    $region36: #{tpu_custom_call.1} parent=1 // pred_region
      %64 = dma.done [#allocation3], 512
    $region37: #{tpu_custom_call.1} parent=1 // pred_fallthru
      _
    // Predicated region
    $region38: #{tpu_custom_call.1} parent=1 // pred_check
      _
    $region39: #{tpu_custom_call.1} parent=1 // pred_check_branch
      %66 = sbr.rel (0) target = $region41
    $region40: #{tpu_custom_call.1} parent=1 // pred_region
      %67 = dma.done [#allocation6], 10752
    $region41: #{tpu_custom_call.1} parent=1 // pred_fallthru
      _
    // Predicated region
    $region42: #{tpu_custom_call.1} parent=1 // pred_check
      _
    $region43: #{tpu_custom_call.1} parent=1 // pred_check_branch
      %69 = sbr.rel (0) target = $region45
    $region44: #{tpu_custom_call.1} parent=1 // pred_region
      %70 = dma.done [#allocation6], 512
    $region45: #{tpu_custom_call.1} parent=1 // pred_fallthru
      _
    %v71 = vld [vmem:[%s0] sm:$0x3]
    %v72 = vld [vmem:[#allocation2] sm:$0xff]
    %v73 = vld [vmem:[#allocation2 + $0x8] sm:$0xff]
    %v74 = vld [vmem:[#allocation2 + $0x10] sm:$0xff]
    %v75 = vld [vmem:[#allocation2 + $0x18] sm:$0xff]
    %v76 = vld [vmem:[%s3] sm:$0x1]
    %v77 = vlaneseq
    %v78 = vshrl.u32 %v77, 7
    %v79 = vsub.s32 0, %v78
    %v80 = vrot.slane %v76, %v79
    %vm81 = vcmask 261120
    %v83 = vsel %vm81, %v71, 0
    %85 = vmatprep.subr.mxu0 0.0
    %86 = vmatpush1.msra.mxu0 %v72
    %87 = vmatprep.subr.mxu0 0.0
    %88 = vmatpush1.msra.mxu0 %v73
    %89 = vmatprep.subr.mxu0 0.0
    %90 = vmatpush1.msra.mxu0 %v74
    %91 = vmatprep.subr.mxu0 0.0
    %92 = vmatpush1.msra.mxu0 %v75
    %93 = vmatprep.subr.mxu0 0.0
    %94 = vmatpush1.msra.mxu0 0.0
    %95 = vmatprep.subr.mxu0 0.0
    %96 = vmatpush1.msra.mxu0 0.0
    %97 = vmatprep.subr.mxu0 0.0
    %98 = vmatpush1.msra.mxu0 0.0
    %99 = vmatprep.subr.mxu0 0.0
    %100 = vmatpush1.msra.mxu0 0.0
    %101 = vmatprep.subr.mxu0 0.0
    %102 = vmatpush1.msra.mxu0 0.0
    %103 = vmatprep.subr.mxu0 0.0
    %104 = vmatpush1.msra.mxu0 0.0
    %105 = vmatprep.subr.mxu0 0.0
    %106 = vmatpush1.msra.mxu0 0.0
    %107 = vmatprep.subr.mxu0 0.0
    %108 = vmatpush1.msra.mxu0 0.0
    %109 = vmatprep.subr.mxu0 0.0
    %110 = vmatpush1.msra.mxu0 0.0
    %111 = vmatprep.subr.mxu0 0.0
    %112 = vmatpush1.msra.mxu0 0.0
    %113 = vmatprep.subr.mxu0 0.0
    %114 = vmatpush1.msra.mxu0 0.0
    %115 = vmatprep.subr.mxu0 0.0
    %116 = vmatpush1.msra.mxu0 0.0
    %117 = vmatprep.subr.mxu0 0.0
    %118 = vmatpush1.msra.mxu0 0.0
    %119 = vmatprep.subr.mxu0 0.0
    %120 = vmatpush1.msra.mxu0 0.0
    %121 = vmatprep.subr.mxu0 0.0
    %122 = vmatpush1.msra.mxu0 0.0
    %123 = vmatprep.subr.mxu0 0.0
    %124 = vmatpush1.msra.mxu0 0.0
    %125 = vmatprep.subr.mxu0 0.0
    %126 = vmatpush1.msra.mxu0 0.0
    %127 = vmatprep.subr.mxu0 0.0
    %128 = vmatpush1.msra.mxu0 0.0
    %129 = vmatprep.subr.mxu0 0.0
    %130 = vmatpush1.msra.mxu0 0.0
    %131 = vmatprep.subr.mxu0 0.0
    %132 = vmatpush1.msra.mxu0 0.0
    %133 = vmatprep.subr.mxu0 0.0
    %134 = vmatpush1.msra.mxu0 0.0
    %135 = vmatprep.subr.mxu0 0.0
    %136 = vmatpush1.msra.mxu0 0.0
    %137 = vmatprep.subr.mxu0 0.0
    %138 = vmatpush1.msra.mxu0 0.0
    %139 = vmatprep.subr.mxu0 0.0
    %140 = vmatpush1.msra.mxu0 0.0
    %141 = vmatprep.subr.mxu0 0.0
    %142 = vmatpush1.msra.mxu0 0.0
    %143 = vmatprep.subr.mxu0 0.0
    %144 = vmatpush1.msra.mxu0 0.0
    %145 = vmatprep.subr.mxu0 0.0
    %146 = vmatpush1.msra.mxu0 0.0
    %147 = vmatprep.subr.mxu0 0.0
    %148 = vmatpush1.msra.mxu0 0.0
    %149 = vmatprep.mubr.f32.mxu0 0.0
    %150 = vmatmul.mubr.f32.gmra.mrb[0].mxu0 %v83
    %v151 = vpop.f32.mrb[0].mxu0
    %v152 = vadd.f32 %v80, %v151
    %v153 = vpop.f32.mrb[0].mxu0
    %154 = vdwg.mxu0
    %v155 = vmax.f32 %v152, 0.0
    %v156 = vld [vmem:[%s1] sm:$0xff]
    %v157 = vld [vmem:[%s1 + $0x8] sm:$0xff]
    %v158 = vld [vmem:[%s1 + $0x10] sm:$0xff]
    %v159 = vld [vmem:[%s1 + $0x18] sm:$0xff]
    %v160 = vld [vmem:[%s1 + $0x20] sm:$0xff]
    %v161 = vld [vmem:[%s1 + $0x28] sm:$0x3]
    %v162 = vld [vmem:[#allocation5] sm:$0xff]
    %v163 = vld [vmem:[#allocation5 + $0x8] sm:$0xff]
    %v164 = vld [vmem:[#allocation5 + $0x10] sm:$0xff]
    %v165 = vld [vmem:[#allocation5 + $0x18] sm:$0xff]
    %v166 = vld [vmem:[#allocation5 + $0x20] sm:$0xff]
    %v167 = vld [vmem:[#allocation5 + $0x28] sm:$0xff]
    %v168 = vld [vmem:[#allocation5 + $0x30] sm:$0xff]
    %v169 = vld [vmem:[#allocation5 + $0x38] sm:$0xff]
    %v170 = vld [vmem:[#allocation5 + $0x40] sm:$0xff]
    %v171 = vld [vmem:[#allocation5 + $0x48] sm:$0xff]
    %v172 = vld [vmem:[#allocation5 + $0x50] sm:$0xff]
    %v173 = vld [vmem:[#allocation5 + $0x58] sm:$0xff]
    %v174 = vld [vmem:[#allocation5 + $0x60] sm:$0xff]
    %v175 = vld [vmem:[#allocation5 + $0x68] sm:$0xff]
    %v176 = vld [vmem:[#allocation5 + $0x70] sm:$0xff]
    %v177 = vld [vmem:[#allocation5 + $0x78] sm:$0xff]
    %v178 = vld [vmem:[#allocation5 + $0x80] sm:$0xff]
    %v179 = vld [vmem:[#allocation5 + $0x88] sm:$0xff]
    %v180 = vld [vmem:[#allocation5 + $0x90] sm:$0xff]
    %v181 = vld [vmem:[#allocation5 + $0x98] sm:$0xff]
    %v182 = vld [vmem:[#allocation5 + $0xa0] sm:$0xff]
    %v183 = vld [vmem:[#allocation5 + $0xa8] sm:$0xff]
    %v184 = vld [vmem:[#allocation5 + $0xb0] sm:$0xff]
    %v185 = vld [vmem:[#allocation5 + $0xb8] sm:$0xff]
    %v186 = vld [vmem:[#allocation5 + $0xc0] sm:$0xff]
    %v187 = vld [vmem:[#allocation5 + $0xc8] sm:$0xff]
    %v188 = vld [vmem:[#allocation5 + $0xd0] sm:$0xff]
    %v189 = vld [vmem:[#allocation5 + $0xd8] sm:$0xff]
    %v190 = vld [vmem:[#allocation5 + $0xe0] sm:$0xff]
    %v191 = vld [vmem:[#allocation5 + $0xe8] sm:$0xff]
    %v192 = vld [vmem:[#allocation5 + $0xf0] sm:$0xff]
    %v193 = vld [vmem:[#allocation5 + $0xf8] sm:$0xff]
    %v194 = vld [vmem:[#allocation5 + $0x100] sm:$0xff]
    %v195 = vld [vmem:[#allocation5 + $0x108] sm:$0xff]
    %v196 = vld [vmem:[#allocation5 + $0x110] sm:$0xff]
    %v197 = vld [vmem:[#allocation5 + $0x118] sm:$0xff]
    %v198 = vld [vmem:[#allocation5 + $0x120] sm:$0xff]
    %v199 = vld [vmem:[#allocation5 + $0x128] sm:$0xff]
    %v200 = vld [vmem:[#allocation5 + $0x130] sm:$0xff]
    %v201 = vld [vmem:[#allocation5 + $0x138] sm:$0xff]
    %v202 = vld [vmem:[#allocation5 + $0x140] sm:$0xff]
    %v203 = vld [vmem:[#allocation5 + $0x148] sm:$0xff]
    %v204 = vld [vmem:[#allocation5 + $0x150] sm:$0xff]
    %v205 = vld [vmem:[#allocation5 + $0x158] sm:$0xff]
    %v206 = vld [vmem:[#allocation5 + $0x160] sm:$0xff]
    %v207 = vld [vmem:[#allocation5 + $0x168] sm:$0xff]
    %v208 = vld [vmem:[#allocation5 + $0x170] sm:$0xff]
    %v209 = vld [vmem:[#allocation5 + $0x178] sm:$0xff]
    %v210 = vld [vmem:[#allocation5 + $0x180] sm:$0xff]
    %v211 = vld [vmem:[#allocation5 + $0x188] sm:$0xff]
    %v212 = vld [vmem:[#allocation5 + $0x190] sm:$0xff]
    %v213 = vld [vmem:[#allocation5 + $0x198] sm:$0xff]
    %v214 = vld [vmem:[#allocation5 + $0x1a0] sm:$0xff]
    %v215 = vld [vmem:[#allocation5 + $0x1a8] sm:$0xff]
    %v216 = vld [vmem:[#allocation5 + $0x1b0] sm:$0xff]
    %v217 = vld [vmem:[#allocation5 + $0x1b8] sm:$0xff]
    %v218 = vld [vmem:[#allocation5 + $0x1c0] sm:$0xff]
    %v219 = vld [vmem:[#allocation5 + $0x1c8] sm:$0xff]
    %v220 = vld [vmem:[#allocation5 + $0x1d0] sm:$0xff]
    %v221 = vld [vmem:[#allocation5 + $0x1d8] sm:$0xff]
    %v222 = vld [vmem:[#allocation5 + $0x1e0] sm:$0xff]
    %v223 = vld [vmem:[#allocation5 + $0x1e8] sm:$0xff]
    %v224 = vld [vmem:[#allocation5 + $0x1f0] sm:$0xff]
    %v225 = vld [vmem:[#allocation5 + $0x1f8] sm:$0xff]
    %v226 = vld [vmem:[#allocation5 + $0x200] sm:$0xff]
    %v227 = vld [vmem:[#allocation5 + $0x208] sm:$0xff]
    %v228 = vld [vmem:[#allocation5 + $0x210] sm:$0xff]
    %v229 = vld [vmem:[#allocation5 + $0x218] sm:$0xff]
    %v230 = vld [vmem:[#allocation5 + $0x220] sm:$0xff]
    %v231 = vld [vmem:[#allocation5 + $0x228] sm:$0xff]
    %v232 = vld [vmem:[#allocation5 + $0x230] sm:$0xff]
    %v233 = vld [vmem:[#allocation5 + $0x238] sm:$0xff]
    %v234 = vld [vmem:[#allocation5 + $0x240] sm:$0xff]
    %v235 = vld [vmem:[#allocation5 + $0x248] sm:$0xff]
    %v236 = vld [vmem:[#allocation5 + $0x250] sm:$0xff]
    %v237 = vld [vmem:[#allocation5 + $0x258] sm:$0xff]
    %v238 = vld [vmem:[#allocation5 + $0x260] sm:$0xff]
    %v239 = vld [vmem:[#allocation5 + $0x268] sm:$0xff]
    %v240 = vld [vmem:[#allocation5 + $0x270] sm:$0xff]
    %v241 = vld [vmem:[#allocation5 + $0x278] sm:$0xff]
    %v242 = vld [vmem:[#allocation5 + $0x280] sm:$0xff]
    %v243 = vld [vmem:[#allocation5 + $0x288] sm:$0xff]
    %v244 = vld [vmem:[#allocation5 + $0x290] sm:$0xff]
    %v245 = vld [vmem:[#allocation5 + $0x298] sm:$0xff]
    %v246 = vld [vmem:[#allocation7] sm:$0xff]
    %v247 = vld [vmem:[#allocation7 + $0x8] sm:$0xff]
    %v248 = vld [vmem:[#allocation7 + $0x10] sm:$0xff]
    %v249 = vld [vmem:[#allocation7 + $0x18] sm:$0xff]
    %v251 = vsel %vm81, %v155, 0
    %253 = vmatprep.subr.mxu0 0.0
    %254 = vmatpush1.msra.mxu0 %v246
    %255 = vmatprep.subr.mxu0 0.0
    %256 = vmatpush1.msra.mxu0 %v247
    %257 = vmatprep.subr.mxu0 0.0
    %258 = vmatpush1.msra.mxu0 %v248
    %259 = vmatprep.subr.mxu0 0.0
    %260 = vmatpush1.msra.mxu0 %v249
    %261 = vmatprep.subr.mxu0 0.0
    %262 = vmatpush1.msra.mxu0 0.0
    %263 = vmatprep.subr.mxu0 0.0
    %264 = vmatpush1.msra.mxu0 0.0
    %265 = vmatprep.subr.mxu0 0.0
    %266 = vmatpush1.msra.mxu0 0.0
    %267 = vmatprep.subr.mxu0 0.0
    %268 = vmatpush1.msra.mxu0 0.0
    %269 = vmatprep.subr.mxu0 0.0
    %270 = vmatpush1.msra.mxu0 0.0
    %271 = vmatprep.subr.mxu0 0.0
    %272 = vmatpush1.msra.mxu0 0.0
    %273 = vmatprep.subr.mxu0 0.0
    %274 = vmatpush1.msra.mxu0 0.0
    %275 = vmatprep.subr.mxu0 0.0
    %276 = vmatpush1.msra.mxu0 0.0
    %277 = vmatprep.subr.mxu0 0.0
    %278 = vmatpush1.msra.mxu0 0.0
    %279 = vmatprep.subr.mxu0 0.0
    %280 = vmatpush1.msra.mxu0 0.0
    %281 = vmatprep.subr.mxu0 0.0
    %282 = vmatpush1.msra.mxu0 0.0
    %283 = vmatprep.subr.mxu0 0.0
    %284 = vmatpush1.msra.mxu0 0.0
    %285 = vmatprep.subr.mxu0 0.0
    %286 = vmatpush1.msra.mxu0 0.0
    %287 = vmatprep.subr.mxu0 0.0
    %288 = vmatpush1.msra.mxu0 0.0
    %289 = vmatprep.subr.mxu0 0.0
    %290 = vmatpush1.msra.mxu0 0.0
    %291 = vmatprep.subr.mxu0 0.0
    %292 = vmatpush1.msra.mxu0 0.0
    %293 = vmatprep.subr.mxu0 0.0
    %294 = vmatpush1.msra.mxu0 0.0
    %295 = vmatprep.subr.mxu0 0.0
    %296 = vmatpush1.msra.mxu0 0.0
    %297 = vmatprep.subr.mxu0 0.0
    %298 = vmatpush1.msra.mxu0 0.0
    %299 = vmatprep.subr.mxu0 0.0
    %300 = vmatpush1.msra.mxu0 0.0
    %301 = vmatprep.subr.mxu0 0.0
    %302 = vmatpush1.msra.mxu0 0.0
    %303 = vmatprep.subr.mxu0 0.0
    %304 = vmatpush1.msra.mxu0 0.0
    %305 = vmatprep.subr.mxu0 0.0
    %306 = vmatpush1.msra.mxu0 0.0
    %307 = vmatprep.subr.mxu0 0.0
    %308 = vmatpush1.msra.mxu0 0.0
    %309 = vmatprep.subr.mxu0 0.0
    %310 = vmatpush1.msra.mxu0 0.0
    %311 = vmatprep.subr.mxu0 0.0
    %312 = vmatpush1.msra.mxu0 0.0
    %313 = vmatprep.subr.mxu0 0.0
    %314 = vmatpush1.msra.mxu0 0.0
    %315 = vmatprep.subr.mxu0 0.0
    %316 = vmatpush1.msra.mxu0 0.0
    %317 = vmatprep.mubr.f32.mxu0 0.0
    %318 = vmatmul.mubr.f32.gmra.mrb[0].mxu0 %v251
    %v319 = vpop.f32.mrb[0].mxu0
    %v320 = vadd.f32 0.0, %v319
    %v321 = vpop.f32.mrb[0].mxu0
    %322 = vdwg.mxu0
    %v329 = vcombine.high %v156, %v156
    %v331 = vunpack.c.l.s4 1983009808
    %v332 = vunpack.c.0.s8 %v331
    %v333 = vlaneseq
    %v334 = vshrl.u32 %v333, 7
    %v335 = vsub.s32 %v332, %v334
    %v336 = vrot.slane %v156, %v335
    %v338 = vunpack.c.l.s4 1983009808
    %v339 = vunpack.c.0.s8 %v338
    %v340 = vlaneseq
    %v341 = vshrl.u32 %v340, 7
    %v342 = vsub.s32 %v339, %v341
    %v343 = vrot.slane %v329, %v342
    %v344 = vcombine.high %v336, %v336
    %v345 = vcombine.high %v343, %v343
    %v346 = vcombine.high %v157, %v157
    %v348 = vunpack.c.l.s4 1983009808
    %v349 = vunpack.c.0.s8 %v348
    %v350 = vlaneseq
    %v351 = vshrl.u32 %v350, 7
    %v352 = vsub.s32 %v349, %v351
    %v353 = vrot.slane %v157, %v352
    %v355 = vunpack.c.l.s4 1983009808
    %v356 = vunpack.c.0.s8 %v355
    %v357 = vlaneseq
    %v358 = vshrl.u32 %v357, 7
    %v359 = vsub.s32 %v356, %v358
    %v360 = vrot.slane %v346, %v359
    %v361 = vcombine.high %v353, %v353
    %v362 = vcombine.high %v360, %v360
    %v363 = vcombine.high %v158, %v158
    %v365 = vunpack.c.l.s4 1983009808
    %v366 = vunpack.c.0.s8 %v365
    %v367 = vlaneseq
    %v368 = vshrl.u32 %v367, 7
    %v369 = vsub.s32 %v366, %v368
    %v370 = vrot.slane %v158, %v369
    %v372 = vunpack.c.l.s4 1983009808
    %v373 = vunpack.c.0.s8 %v372
    %v374 = vlaneseq
    %v375 = vshrl.u32 %v374, 7
    %v376 = vsub.s32 %v373, %v375
    %v377 = vrot.slane %v363, %v376
    %v378 = vcombine.high %v370, %v370
    %v379 = vcombine.high %v377, %v377
    %v380 = vcombine.high %v159, %v159
    %v382 = vunpack.c.l.s4 1983009808
    %v383 = vunpack.c.0.s8 %v382
    %v384 = vlaneseq
    %v385 = vshrl.u32 %v384, 7
    %v386 = vsub.s32 %v383, %v385
    %v387 = vrot.slane %v159, %v386
    %v389 = vunpack.c.l.s4 1983009808
    %v390 = vunpack.c.0.s8 %v389
    %v391 = vlaneseq
    %v392 = vshrl.u32 %v391, 7
    %v393 = vsub.s32 %v390, %v392
    %v394 = vrot.slane %v380, %v393
    %v395 = vcombine.high %v387, %v387
    %v396 = vcombine.high %v394, %v394
    %v397 = vcombine.high %v160, %v160
    %v399 = vunpack.c.l.s4 1983009808
    %v400 = vunpack.c.0.s8 %v399
    %v401 = vlaneseq
    %v402 = vshrl.u32 %v401, 7
    %v403 = vsub.s32 %v400, %v402
    %v404 = vrot.slane %v160, %v403
    %v406 = vunpack.c.l.s4 1983009808
    %v407 = vunpack.c.0.s8 %v406
    %v408 = vlaneseq
    %v409 = vshrl.u32 %v408, 7
    %v410 = vsub.s32 %v407, %v409
    %v411 = vrot.slane %v397, %v410
    %v412 = vcombine.high %v404, %v404
    %v413 = vcombine.high %v411, %v411
    %v415 = vunpack.c.l.s4 1983009808
    %v416 = vunpack.c.0.s8 %v415
    %v417 = vlaneseq
    %v418 = vshrl.u32 %v417, 7
    %v419 = vsub.s32 %v416, %v418
    %v420 = vrot.slane %v161, %v419
    %442 = vmatprep.subr.mxu0 %v163
    %443 = vmatpush1.xpose.msra.mxu0 %v162
    %444 = vmatprep.subr.mxu0 %v184
    %445 = vmatpush1.xpose.msra.mxu0 %v183
    %446 = vmatprep.subr.mxu0 %v205
    %447 = vmatpush1.xpose.msra.mxu0 %v204
    %448 = vmatprep.subr.mxu0 %v226
    %449 = vmatpush1.xpose.msra.mxu0 %v225
    %450 = vmatprep.subr.mxu0 0.0
    %451 = vmatpush1.xpose.msra.mxu0 0.0
    %452 = vmatprep.subr.mxu0 0.0
    %453 = vmatpush1.xpose.msra.mxu0 0.0
    %454 = vmatprep.subr.mxu0 0.0
    %455 = vmatpush1.xpose.msra.mxu0 0.0
    %456 = vmatprep.subr.mxu0 0.0
    %457 = vmatpush1.xpose.msra.mxu0 0.0
    %458 = vmatprep.subr.mxu0 0.0
    %459 = vmatpush1.xpose.msra.mxu0 0.0
    %460 = vmatprep.subr.mxu0 0.0
    %461 = vmatpush1.xpose.msra.mxu0 0.0
    %462 = vmatprep.subr.mxu0 0.0
    %463 = vmatpush1.xpose.msra.mxu0 0.0
    %464 = vmatprep.subr.mxu0 0.0
    %465 = vmatpush1.xpose.msra.mxu0 0.0
    %466 = vmatprep.subr.mxu0 0.0
    %467 = vmatpush1.xpose.msra.mxu0 0.0
    %468 = vmatprep.subr.mxu0 0.0
    %469 = vmatpush1.xpose.msra.mxu0 0.0
    %470 = vmatprep.subr.mxu0 0.0
    %471 = vmatpush1.xpose.msra.mxu0 0.0
    %472 = vmatprep.subr.mxu0 0.0
    %473 = vmatpush1.xpose.msra.mxu0 0.0
    %474 = vmatprep.subr.mxu0 0.0
    %475 = vmatpush1.xpose.msra.mxu0 0.0
    %476 = vmatprep.subr.mxu0 0.0
    %477 = vmatpush1.xpose.msra.mxu0 0.0
    %478 = vmatprep.subr.mxu0 0.0
    %479 = vmatpush1.xpose.msra.mxu0 0.0
    %480 = vmatprep.subr.mxu0 0.0
    %481 = vmatpush1.xpose.msra.mxu0 0.0
    %482 = vmatprep.subr.mxu0 0.0
    %483 = vmatpush1.xpose.msra.mxu0 0.0
    %484 = vmatprep.subr.mxu0 0.0
    %485 = vmatpush1.xpose.msra.mxu0 0.0
    %486 = vmatprep.subr.mxu0 0.0
    %487 = vmatpush1.xpose.msra.mxu0 0.0
    %488 = vmatprep.subr.mxu0 0.0
    %489 = vmatpush1.xpose.msra.mxu0 0.0
    %490 = vmatprep.subr.mxu0 0.0
    %491 = vmatpush1.xpose.msra.mxu0 0.0
    %492 = vmatprep.subr.mxu0 0.0
    %493 = vmatpush1.xpose.msra.mxu0 0.0
    %494 = vmatprep.subr.mxu0 0.0
    %495 = vmatpush1.xpose.msra.mxu0 0.0
    %496 = vmatprep.subr.mxu0 0.0
    %497 = vmatpush1.xpose.msra.mxu0 0.0
    %498 = vmatprep.subr.mxu0 0.0
    %499 = vmatpush1.xpose.msra.mxu0 0.0
    %500 = vmatprep.subr.mxu0 0.0
    %501 = vmatpush1.xpose.msra.mxu0 0.0
    %502 = vmatprep.subr.mxu0 0.0
    %503 = vmatpush1.xpose.msra.mxu0 0.0
    %504 = vmatprep.subr.mxu0 0.0
    %505 = vmatpush1.xpose.msra.mxu0 0.0
    %506 = vmatprep.mubr.f32.mxu0 %v344
    %507 = vmatmul.mubr.f32.gmra.mrb[0].mxu0 %v336
    %v508 = vpop.f32.mrb[0].mxu0
    %v509 = vadd.f32 %v320, %v508
    %v510 = vpop.f32.mrb[0].mxu0
    %511 = vdwg.mxu0
    %512 = vmatprep.subr.mxu0 %v165
    %513 = vmatpush1.xpose.msra.mxu0 %v164
    %514 = vmatprep.subr.mxu0 %v186
    %515 = vmatpush1.xpose.msra.mxu0 %v185
    %516 = vmatprep.subr.mxu0 %v207
    %517 = vmatpush1.xpose.msra.mxu0 %v206
    %518 = vmatprep.subr.mxu0 %v228
    %519 = vmatpush1.xpose.msra.mxu0 %v227
    %520 = vmatprep.subr.mxu0 0.0
    %521 = vmatpush1.xpose.msra.mxu0 0.0
    %522 = vmatprep.subr.mxu0 0.0
    %523 = vmatpush1.xpose.msra.mxu0 0.0
    %524 = vmatprep.subr.mxu0 0.0
    %525 = vmatpush1.xpose.msra.mxu0 0.0
    %526 = vmatprep.subr.mxu0 0.0
    %527 = vmatpush1.xpose.msra.mxu0 0.0
    %528 = vmatprep.subr.mxu0 0.0
    %529 = vmatpush1.xpose.msra.mxu0 0.0
    %530 = vmatprep.subr.mxu0 0.0
    %531 = vmatpush1.xpose.msra.mxu0 0.0
    %532 = vmatprep.subr.mxu0 0.0
    %533 = vmatpush1.xpose.msra.mxu0 0.0
    %534 = vmatprep.subr.mxu0 0.0
    %535 = vmatpush1.xpose.msra.mxu0 0.0
    %536 = vmatprep.subr.mxu0 0.0
    %537 = vmatpush1.xpose.msra.mxu0 0.0
    %538 = vmatprep.subr.mxu0 0.0
    %539 = vmatpush1.xpose.msra.mxu0 0.0
    %540 = vmatprep.subr.mxu0 0.0
    %541 = vmatpush1.xpose.msra.mxu0 0.0
    %542 = vmatprep.subr.mxu0 0.0
    %543 = vmatpush1.xpose.msra.mxu0 0.0
    %544 = vmatprep.subr.mxu0 0.0
    %545 = vmatpush1.xpose.msra.mxu0 0.0
    %546 = vmatprep.subr.mxu0 0.0
    %547 = vmatpush1.xpose.msra.mxu0 0.0
    %548 = vmatprep.subr.mxu0 0.0
    %549 = vmatpush1.xpose.msra.mxu0 0.0
    %550 = vmatprep.subr.mxu0 0.0
    %551 = vmatpush1.xpose.msra.mxu0 0.0
    %552 = vmatprep.subr.mxu0 0.0
    %553 = vmatpush1.xpose.msra.mxu0 0.0
    %554 = vmatprep.subr.mxu0 0.0
    %555 = vmatpush1.xpose.msra.mxu0 0.0
    %556 = vmatprep.subr.mxu0 0.0
    %557 = vmatpush1.xpose.msra.mxu0 0.0
    %558 = vmatprep.subr.mxu0 0.0
    %559 = vmatpush1.xpose.msra.mxu0 0.0
    %560 = vmatprep.subr.mxu0 0.0
    %561 = vmatpush1.xpose.msra.mxu0 0.0
    %562 = vmatprep.subr.mxu0 0.0
    %563 = vmatpush1.xpose.msra.mxu0 0.0
    %564 = vmatprep.subr.mxu0 0.0
    %565 = vmatpush1.xpose.msra.mxu0 0.0
    %566 = vmatprep.subr.mxu0 0.0
    %567 = vmatpush1.xpose.msra.mxu0 0.0
    %568 = vmatprep.subr.mxu0 0.0
    %569 = vmatpush1.xpose.msra.mxu0 0.0
    %570 = vmatprep.subr.mxu0 0.0
    %571 = vmatpush1.xpose.msra.mxu0 0.0
    %572 = vmatprep.subr.mxu0 0.0
    %573 = vmatpush1.xpose.msra.mxu0 0.0
    %574 = vmatprep.subr.mxu0 0.0
    %575 = vmatpush1.xpose.msra.mxu0 0.0
    %576 = vmatprep.mubr.f32.mxu0 %v345
    %577 = vmatmul.mubr.f32.gmra.mrb[0].mxu0 %v343
    %v578 = vpop.f32.mrb[0].mxu0
    %v579 = vadd.f32 %v509, %v578
    %v580 = vpop.f32.mrb[0].mxu0
    %581 = vdwg.mxu0
    %582 = vmatprep.subr.mxu0 %v167
    %583 = vmatpush1.xpose.msra.mxu0 %v166
    %584 = vmatprep.subr.mxu0 %v188
    %585 = vmatpush1.xpose.msra.mxu0 %v187
    %586 = vmatprep.subr.mxu0 %v209
    %587 = vmatpush1.xpose.msra.mxu0 %v208
    %588 = vmatprep.subr.mxu0 %v230
    %589 = vmatpush1.xpose.msra.mxu0 %v229
    %590 = vmatprep.subr.mxu0 0.0
    %591 = vmatpush1.xpose.msra.mxu0 0.0
    %592 = vmatprep.subr.mxu0 0.0
    %593 = vmatpush1.xpose.msra.mxu0 0.0
    %594 = vmatprep.subr.mxu0 0.0
    %595 = vmatpush1.xpose.msra.mxu0 0.0
    %596 = vmatprep.subr.mxu0 0.0
    %597 = vmatpush1.xpose.msra.mxu0 0.0
    %598 = vmatprep.subr.mxu0 0.0
    %599 = vmatpush1.xpose.msra.mxu0 0.0
    %600 = vmatprep.subr.mxu0 0.0
    %601 = vmatpush1.xpose.msra.mxu0 0.0
    %602 = vmatprep.subr.mxu0 0.0
    %603 = vmatpush1.xpose.msra.mxu0 0.0
    %604 = vmatprep.subr.mxu0 0.0
    %605 = vmatpush1.xpose.msra.mxu0 0.0
    %606 = vmatprep.subr.mxu0 0.0
    %607 = vmatpush1.xpose.msra.mxu0 0.0
    %608 = vmatprep.subr.mxu0 0.0
    %609 = vmatpush1.xpose.msra.mxu0 0.0
    %610 = vmatprep.subr.mxu0 0.0
    %611 = vmatpush1.xpose.msra.mxu0 0.0
    %612 = vmatprep.subr.mxu0 0.0
    %613 = vmatpush1.xpose.msra.mxu0 0.0
    %614 = vmatprep.subr.mxu0 0.0
    %615 = vmatpush1.xpose.msra.mxu0 0.0
    %616 = vmatprep.subr.mxu0 0.0
    %617 = vmatpush1.xpose.msra.mxu0 0.0
    %618 = vmatprep.subr.mxu0 0.0
    %619 = vmatpush1.xpose.msra.mxu0 0.0
    %620 = vmatprep.subr.mxu0 0.0
    %621 = vmatpush1.xpose.msra.mxu0 0.0
    %622 = vmatprep.subr.mxu0 0.0
    %623 = vmatpush1.xpose.msra.mxu0 0.0
    %624 = vmatprep.subr.mxu0 0.0
    %625 = vmatpush1.xpose.msra.mxu0 0.0
    %626 = vmatprep.subr.mxu0 0.0
    %627 = vmatpush1.xpose.msra.mxu0 0.0
    %628 = vmatprep.subr.mxu0 0.0
    %629 = vmatpush1.xpose.msra.mxu0 0.0
    %630 = vmatprep.subr.mxu0 0.0
    %631 = vmatpush1.xpose.msra.mxu0 0.0
    %632 = vmatprep.subr.mxu0 0.0
    %633 = vmatpush1.xpose.msra.mxu0 0.0
    %634 = vmatprep.subr.mxu0 0.0
    %635 = vmatpush1.xpose.msra.mxu0 0.0
    %636 = vmatprep.subr.mxu0 0.0
    %637 = vmatpush1.xpose.msra.mxu0 0.0
    %638 = vmatprep.subr.mxu0 0.0
    %639 = vmatpush1.xpose.msra.mxu0 0.0
    %640 = vmatprep.subr.mxu0 0.0
    %641 = vmatpush1.xpose.msra.mxu0 0.0
    %642 = vmatprep.subr.mxu0 0.0
    %643 = vmatpush1.xpose.msra.mxu0 0.0
    %644 = vmatprep.subr.mxu0 0.0
    %645 = vmatpush1.xpose.msra.mxu0 0.0
    %646 = vmatprep.mubr.f32.mxu0 %v361
    %647 = vmatmul.mubr.f32.gmra.mrb[0].mxu0 %v353
    %v648 = vpop.f32.mrb[0].mxu0
    %v649 = vadd.f32 %v579, %v648
    %v650 = vpop.f32.mrb[0].mxu0
    %651 = vdwg.mxu0
    %652 = vmatprep.subr.mxu0 %v169
    %653 = vmatpush1.xpose.msra.mxu0 %v168
    %654 = vmatprep.subr.mxu0 %v190
    %655 = vmatpush1.xpose.msra.mxu0 %v189
    %656 = vmatprep.subr.mxu0 %v211
    %657 = vmatpush1.xpose.msra.mxu0 %v210
    %658 = vmatprep.subr.mxu0 %v232
    %659 = vmatpush1.xpose.msra.mxu0 %v231
    %660 = vmatprep.subr.mxu0 0.0
    %661 = vmatpush1.xpose.msra.mxu0 0.0
    %662 = vmatprep.subr.mxu0 0.0
    %663 = vmatpush1.xpose.msra.mxu0 0.0
    %664 = vmatprep.subr.mxu0 0.0
    %665 = vmatpush1.xpose.msra.mxu0 0.0
    %666 = vmatprep.subr.mxu0 0.0
    %667 = vmatpush1.xpose.msra.mxu0 0.0
    %668 = vmatprep.subr.mxu0 0.0
    %669 = vmatpush1.xpose.msra.mxu0 0.0
    %670 = vmatprep.subr.mxu0 0.0
    %671 = vmatpush1.xpose.msra.mxu0 0.0
    %672 = vmatprep.subr.mxu0 0.0
    %673 = vmatpush1.xpose.msra.mxu0 0.0
    %674 = vmatprep.subr.mxu0 0.0
    %675 = vmatpush1.xpose.msra.mxu0 0.0
    %676 = vmatprep.subr.mxu0 0.0
    %677 = vmatpush1.xpose.msra.mxu0 0.0
    %678 = vmatprep.subr.mxu0 0.0
    %679 = vmatpush1.xpose.msra.mxu0 0.0
    %680 = vmatprep.subr.mxu0 0.0
    %681 = vmatpush1.xpose.msra.mxu0 0.0
    %682 = vmatprep.subr.mxu0 0.0
    %683 = vmatpush1.xpose.msra.mxu0 0.0
    %684 = vmatprep.subr.mxu0 0.0
    %685 = vmatpush1.xpose.msra.mxu0 0.0
    %686 = vmatprep.subr.mxu0 0.0
    %687 = vmatpush1.xpose.msra.mxu0 0.0
    %688 = vmatprep.subr.mxu0 0.0
    %689 = vmatpush1.xpose.msra.mxu0 0.0
    %690 = vmatprep.subr.mxu0 0.0
    %691 = vmatpush1.xpose.msra.mxu0 0.0
    %692 = vmatprep.subr.mxu0 0.0
    %693 = vmatpush1.xpose.msra.mxu0 0.0
    %694 = vmatprep.subr.mxu0 0.0
    %695 = vmatpush1.xpose.msra.mxu0 0.0
    %696 = vmatprep.subr.mxu0 0.0
    %697 = vmatpush1.xpose.msra.mxu0 0.0
    %698 = vmatprep.subr.mxu0 0.0
    %699 = vmatpush1.xpose.msra.mxu0 0.0
    %700 = vmatprep.subr.mxu0 0.0
    %701 = vmatpush1.xpose.msra.mxu0 0.0
    %702 = vmatprep.subr.mxu0 0.0
    %703 = vmatpush1.xpose.msra.mxu0 0.0
    %704 = vmatprep.subr.mxu0 0.0
    %705 = vmatpush1.xpose.msra.mxu0 0.0
    %706 = vmatprep.subr.mxu0 0.0
    %707 = vmatpush1.xpose.msra.mxu0 0.0
    %708 = vmatprep.subr.mxu0 0.0
    %709 = vmatpush1.xpose.msra.mxu0 0.0
    %710 = vmatprep.subr.mxu0 0.0
    %711 = vmatpush1.xpose.msra.mxu0 0.0
    %712 = vmatprep.subr.mxu0 0.0
    %713 = vmatpush1.xpose.msra.mxu0 0.0
    %714 = vmatprep.subr.mxu0 0.0
    %715 = vmatpush1.xpose.msra.mxu0 0.0
    %716 = vmatprep.mubr.f32.mxu0 %v362
    %717 = vmatmul.mubr.f32.gmra.mrb[0].mxu0 %v360
    %v718 = vpop.f32.mrb[0].mxu0
    %v719 = vadd.f32 %v649, %v718
    %v720 = vpop.f32.mrb[0].mxu0
    %721 = vdwg.mxu0
    %722 = vmatprep.subr.mxu0 %v171
    %723 = vmatpush1.xpose.msra.mxu0 %v170
    %724 = vmatprep.subr.mxu0 %v192
    %725 = vmatpush1.xpose.msra.mxu0 %v191
    %726 = vmatprep.subr.mxu0 %v213
    %727 = vmatpush1.xpose.msra.mxu0 %v212
    %728 = vmatprep.subr.mxu0 %v234
    %729 = vmatpush1.xpose.msra.mxu0 %v233
    %730 = vmatprep.subr.mxu0 0.0
    %731 = vmatpush1.xpose.msra.mxu0 0.0
    %732 = vmatprep.subr.mxu0 0.0
    %733 = vmatpush1.xpose.msra.mxu0 0.0
    %734 = vmatprep.subr.mxu0 0.0
    %735 = vmatpush1.xpose.msra.mxu0 0.0
    %736 = vmatprep.subr.mxu0 0.0
    %737 = vmatpush1.xpose.msra.mxu0 0.0
    %738 = vmatprep.subr.mxu0 0.0
    %739 = vmatpush1.xpose.msra.mxu0 0.0
    %740 = vmatprep.subr.mxu0 0.0
    %741 = vmatpush1.xpose.msra.mxu0 0.0
    %742 = vmatprep.subr.mxu0 0.0
    %743 = vmatpush1.xpose.msra.mxu0 0.0
    %744 = vmatprep.subr.mxu0 0.0
    %745 = vmatpush1.xpose.msra.mxu0 0.0
    %746 = vmatprep.subr.mxu0 0.0
    %747 = vmatpush1.xpose.msra.mxu0 0.0
    %748 = vmatprep.subr.mxu0 0.0
    %749 = vmatpush1.xpose.msra.mxu0 0.0
    %750 = vmatprep.subr.mxu0 0.0
    %751 = vmatpush1.xpose.msra.mxu0 0.0
    %752 = vmatprep.subr.mxu0 0.0
    %753 = vmatpush1.xpose.msra.mxu0 0.0
    %754 = vmatprep.subr.mxu0 0.0
    %755 = vmatpush1.xpose.msra.mxu0 0.0
    %756 = vmatprep.subr.mxu0 0.0
    %757 = vmatpush1.xpose.msra.mxu0 0.0
    %758 = vmatprep.subr.mxu0 0.0
    %759 = vmatpush1.xpose.msra.mxu0 0.0
    %760 = vmatprep.subr.mxu0 0.0
    %761 = vmatpush1.xpose.msra.mxu0 0.0
    %762 = vmatprep.subr.mxu0 0.0
    %763 = vmatpush1.xpose.msra.mxu0 0.0
    %764 = vmatprep.subr.mxu0 0.0
    %765 = vmatpush1.xpose.msra.mxu0 0.0
    %766 = vmatprep.subr.mxu0 0.0
    %767 = vmatpush1.xpose.msra.mxu0 0.0
    %768 = vmatprep.subr.mxu0 0.0
    %769 = vmatpush1.xpose.msra.mxu0 0.0
    %770 = vmatprep.subr.mxu0 0.0
    %771 = vmatpush1.xpose.msra.mxu0 0.0
    %772 = vmatprep.subr.mxu0 0.0
    %773 = vmatpush1.xpose.msra.mxu0 0.0
    %774 = vmatprep.subr.mxu0 0.0
    %775 = vmatpush1.xpose.msra.mxu0 0.0
    %776 = vmatprep.subr.mxu0 0.0
    %777 = vmatpush1.xpose.msra.mxu0 0.0
    %778 = vmatprep.subr.mxu0 0.0
    %779 = vmatpush1.xpose.msra.mxu0 0.0
    %780 = vmatprep.subr.mxu0 0.0
    %781 = vmatpush1.xpose.msra.mxu0 0.0
    %782 = vmatprep.subr.mxu0 0.0
    %783 = vmatpush1.xpose.msra.mxu0 0.0
    %784 = vmatprep.subr.mxu0 0.0
    %785 = vmatpush1.xpose.msra.mxu0 0.0
    %786 = vmatprep.mubr.f32.mxu0 %v378
    %787 = vmatmul.mubr.f32.gmra.mrb[0].mxu0 %v370
    %v788 = vpop.f32.mrb[0].mxu0
    %v789 = vadd.f32 %v719, %v788
    %v790 = vpop.f32.mrb[0].mxu0
    %791 = vdwg.mxu0
    %792 = vmatprep.subr.mxu0 %v173
    %793 = vmatpush1.xpose.msra.mxu0 %v172
    %794 = vmatprep.subr.mxu0 %v194
    %795 = vmatpush1.xpose.msra.mxu0 %v193
    %796 = vmatprep.subr.mxu0 %v215
    %797 = vmatpush1.xpose.msra.mxu0 %v214
    %798 = vmatprep.subr.mxu0 %v236
    %799 = vmatpush1.xpose.msra.mxu0 %v235
    %800 = vmatprep.subr.mxu0 0.0
    %801 = vmatpush1.xpose.msra.mxu0 0.0
    %802 = vmatprep.subr.mxu0 0.0
    %803 = vmatpush1.xpose.msra.mxu0 0.0
    %804 = vmatprep.subr.mxu0 0.0
    %805 = vmatpush1.xpose.msra.mxu0 0.0
    %806 = vmatprep.subr.mxu0 0.0
    %807 = vmatpush1.xpose.msra.mxu0 0.0
    %808 = vmatprep.subr.mxu0 0.0
    %809 = vmatpush1.xpose.msra.mxu0 0.0
    %810 = vmatprep.subr.mxu0 0.0
    %811 = vmatpush1.xpose.msra.mxu0 0.0
    %812 = vmatprep.subr.mxu0 0.0
    %813 = vmatpush1.xpose.msra.mxu0 0.0
    %814 = vmatprep.subr.mxu0 0.0
    %815 = vmatpush1.xpose.msra.mxu0 0.0
    %816 = vmatprep.subr.mxu0 0.0
    %817 = vmatpush1.xpose.msra.mxu0 0.0
    %818 = vmatprep.subr.mxu0 0.0
    %819 = vmatpush1.xpose.msra.mxu0 0.0
    %820 = vmatprep.subr.mxu0 0.0
    %821 = vmatpush1.xpose.msra.mxu0 0.0
    %822 = vmatprep.subr.mxu0 0.0
    %823 = vmatpush1.xpose.msra.mxu0 0.0
    %824 = vmatprep.subr.mxu0 0.0
    %825 = vmatpush1.xpose.msra.mxu0 0.0
    %826 = vmatprep.subr.mxu0 0.0
    %827 = vmatpush1.xpose.msra.mxu0 0.0
    %828 = vmatprep.subr.mxu0 0.0
    %829 = vmatpush1.xpose.msra.mxu0 0.0
    %830 = vmatprep.subr.mxu0 0.0
    %831 = vmatpush1.xpose.msra.mxu0 0.0
    %832 = vmatprep.subr.mxu0 0.0
    %833 = vmatpush1.xpose.msra.mxu0 0.0
    %834 = vmatprep.subr.mxu0 0.0
    %835 = vmatpush1.xpose.msra.mxu0 0.0
    %836 = vmatprep.subr.mxu0 0.0
    %837 = vmatpush1.xpose.msra.mxu0 0.0
    %838 = vmatprep.subr.mxu0 0.0
    %839 = vmatpush1.xpose.msra.mxu0 0.0
    %840 = vmatprep.subr.mxu0 0.0
    %841 = vmatpush1.xpose.msra.mxu0 0.0
    %842 = vmatprep.subr.mxu0 0.0
    %843 = vmatpush1.xpose.msra.mxu0 0.0
    %844 = vmatprep.subr.mxu0 0.0
    %845 = vmatpush1.xpose.msra.mxu0 0.0
    %846 = vmatprep.subr.mxu0 0.0
    %847 = vmatpush1.xpose.msra.mxu0 0.0
    %848 = vmatprep.subr.mxu0 0.0
    %849 = vmatpush1.xpose.msra.mxu0 0.0
    %850 = vmatprep.subr.mxu0 0.0
    %851 = vmatpush1.xpose.msra.mxu0 0.0
    %852 = vmatprep.subr.mxu0 0.0
    %853 = vmatpush1.xpose.msra.mxu0 0.0
    %854 = vmatprep.subr.mxu0 0.0
    %855 = vmatpush1.xpose.msra.mxu0 0.0
    %856 = vmatprep.mubr.f32.mxu0 %v379
    %857 = vmatmul.mubr.f32.gmra.mrb[0].mxu0 %v377
    %v858 = vpop.f32.mrb[0].mxu0
    %v859 = vadd.f32 %v789, %v858
    %v860 = vpop.f32.mrb[0].mxu0
    %861 = vdwg.mxu0
    %862 = vmatprep.subr.mxu0 %v175
    %863 = vmatpush1.xpose.msra.mxu0 %v174
    %864 = vmatprep.subr.mxu0 %v196
    %865 = vmatpush1.xpose.msra.mxu0 %v195
    %866 = vmatprep.subr.mxu0 %v217
    %867 = vmatpush1.xpose.msra.mxu0 %v216
    %868 = vmatprep.subr.mxu0 %v238
    %869 = vmatpush1.xpose.msra.mxu0 %v237
    %870 = vmatprep.subr.mxu0 0.0
    %871 = vmatpush1.xpose.msra.mxu0 0.0
    %872 = vmatprep.subr.mxu0 0.0
    %873 = vmatpush1.xpose.msra.mxu0 0.0
    %874 = vmatprep.subr.mxu0 0.0
    %875 = vmatpush1.xpose.msra.mxu0 0.0
    %876 = vmatprep.subr.mxu0 0.0
    %877 = vmatpush1.xpose.msra.mxu0 0.0
    %878 = vmatprep.subr.mxu0 0.0
    %879 = vmatpush1.xpose.msra.mxu0 0.0
    %880 = vmatprep.subr.mxu0 0.0
    %881 = vmatpush1.xpose.msra.mxu0 0.0
    %882 = vmatprep.subr.mxu0 0.0
    %883 = vmatpush1.xpose.msra.mxu0 0.0
    %884 = vmatprep.subr.mxu0 0.0
    %885 = vmatpush1.xpose.msra.mxu0 0.0
    %886 = vmatprep.subr.mxu0 0.0
    %887 = vmatpush1.xpose.msra.mxu0 0.0
    %888 = vmatprep.subr.mxu0 0.0
    %889 = vmatpush1.xpose.msra.mxu0 0.0
    %890 = vmatprep.subr.mxu0 0.0
    %891 = vmatpush1.xpose.msra.mxu0 0.0
    %892 = vmatprep.subr.mxu0 0.0
    %893 = vmatpush1.xpose.msra.mxu0 0.0
    %894 = vmatprep.subr.mxu0 0.0
    %895 = vmatpush1.xpose.msra.mxu0 0.0
    %896 = vmatprep.subr.mxu0 0.0
    %897 = vmatpush1.xpose.msra.mxu0 0.0
    %898 = vmatprep.subr.mxu0 0.0
    %899 = vmatpush1.xpose.msra.mxu0 0.0
    %900 = vmatprep.subr.mxu0 0.0
    %901 = vmatpush1.xpose.msra.mxu0 0.0
    %902 = vmatprep.subr.mxu0 0.0
    %903 = vmatpush1.xpose.msra.mxu0 0.0
    %904 = vmatprep.subr.mxu0 0.0
    %905 = vmatpush1.xpose.msra.mxu0 0.0
    %906 = vmatprep.subr.mxu0 0.0
    %907 = vmatpush1.xpose.msra.mxu0 0.0
    %908 = vmatprep.subr.mxu0 0.0
    %909 = vmatpush1.xpose.msra.mxu0 0.0
    %910 = vmatprep.subr.mxu0 0.0
    %911 = vmatpush1.xpose.msra.mxu0 0.0
    %912 = vmatprep.subr.mxu0 0.0
    %913 = vmatpush1.xpose.msra.mxu0 0.0
    %914 = vmatprep.subr.mxu0 0.0
    %915 = vmatpush1.xpose.msra.mxu0 0.0
    %916 = vmatprep.subr.mxu0 0.0
    %917 = vmatpush1.xpose.msra.mxu0 0.0
    %918 = vmatprep.subr.mxu0 0.0
    %919 = vmatpush1.xpose.msra.mxu0 0.0
    %920 = vmatprep.subr.mxu0 0.0
    %921 = vmatpush1.xpose.msra.mxu0 0.0
    %922 = vmatprep.subr.mxu0 0.0
    %923 = vmatpush1.xpose.msra.mxu0 0.0
    %924 = vmatprep.subr.mxu0 0.0
    %925 = vmatpush1.xpose.msra.mxu0 0.0
    %926 = vmatprep.mubr.f32.mxu0 %v395
    %927 = vmatmul.mubr.f32.gmra.mrb[0].mxu0 %v387
    %v928 = vpop.f32.mrb[0].mxu0
    %v929 = vadd.f32 %v859, %v928
    %v930 = vpop.f32.mrb[0].mxu0
    %931 = vdwg.mxu0
    %932 = vmatprep.subr.mxu0 %v177
    %933 = vmatpush1.xpose.msra.mxu0 %v176
    %934 = vmatprep.subr.mxu0 %v198
    %935 = vmatpush1.xpose.msra.mxu0 %v197
    %936 = vmatprep.subr.mxu0 %v219
    %937 = vmatpush1.xpose.msra.mxu0 %v218
    %938 = vmatprep.subr.mxu0 %v240
    %939 = vmatpush1.xpose.msra.mxu0 %v239
    %940 = vmatprep.subr.mxu0 0.0
    %941 = vmatpush1.xpose.msra.mxu0 0.0
    %942 = vmatprep.subr.mxu0 0.0
    %943 = vmatpush1.xpose.msra.mxu0 0.0
    %944 = vmatprep.subr.mxu0 0.0
    %945 = vmatpush1.xpose.msra.mxu0 0.0
    %946 = vmatprep.subr.mxu0 0.0
    %947 = vmatpush1.xpose.msra.mxu0 0.0
    %948 = vmatprep.subr.mxu0 0.0
    %949 = vmatpush1.xpose.msra.mxu0 0.0
    %950 = vmatprep.subr.mxu0 0.0
    %951 = vmatpush1.xpose.msra.mxu0 0.0
    %952 = vmatprep.subr.mxu0 0.0
    %953 = vmatpush1.xpose.msra.mxu0 0.0
    %954 = vmatprep.subr.mxu0 0.0
    %955 = vmatpush1.xpose.msra.mxu0 0.0
    %956 = vmatprep.subr.mxu0 0.0
    %957 = vmatpush1.xpose.msra.mxu0 0.0
    %958 = vmatprep.subr.mxu0 0.0
    %959 = vmatpush1.xpose.msra.mxu0 0.0
    %960 = vmatprep.subr.mxu0 0.0
    %961 = vmatpush1.xpose.msra.mxu0 0.0
    %962 = vmatprep.subr.mxu0 0.0
    %963 = vmatpush1.xpose.msra.mxu0 0.0
    %964 = vmatprep.subr.mxu0 0.0
    %965 = vmatpush1.xpose.msra.mxu0 0.0
    %966 = vmatprep.subr.mxu0 0.0
    %967 = vmatpush1.xpose.msra.mxu0 0.0
    %968 = vmatprep.subr.mxu0 0.0
    %969 = vmatpush1.xpose.msra.mxu0 0.0
    %970 = vmatprep.subr.mxu0 0.0
    %971 = vmatpush1.xpose.msra.mxu0 0.0
    %972 = vmatprep.subr.mxu0 0.0
    %973 = vmatpush1.xpose.msra.mxu0 0.0
    %974 = vmatprep.subr.mxu0 0.0
    %975 = vmatpush1.xpose.msra.mxu0 0.0
    %976 = vmatprep.subr.mxu0 0.0
    %977 = vmatpush1.xpose.msra.mxu0 0.0
    %978 = vmatprep.subr.mxu0 0.0
    %979 = vmatpush1.xpose.msra.mxu0 0.0
    %980 = vmatprep.subr.mxu0 0.0
    %981 = vmatpush1.xpose.msra.mxu0 0.0
    %982 = vmatprep.subr.mxu0 0.0
    %983 = vmatpush1.xpose.msra.mxu0 0.0
    %984 = vmatprep.subr.mxu0 0.0
    %985 = vmatpush1.xpose.msra.mxu0 0.0
    %986 = vmatprep.subr.mxu0 0.0
    %987 = vmatpush1.xpose.msra.mxu0 0.0
    %988 = vmatprep.subr.mxu0 0.0
    %989 = vmatpush1.xpose.msra.mxu0 0.0
    %990 = vmatprep.subr.mxu0 0.0
    %991 = vmatpush1.xpose.msra.mxu0 0.0
    %992 = vmatprep.subr.mxu0 0.0
    %993 = vmatpush1.xpose.msra.mxu0 0.0
    %994 = vmatprep.subr.mxu0 0.0
    %995 = vmatpush1.xpose.msra.mxu0 0.0
    %996 = vmatprep.mubr.f32.mxu0 %v396
    %997 = vmatmul.mubr.f32.gmra.mrb[0].mxu0 %v394
    %v998 = vpop.f32.mrb[0].mxu0
    %v999 = vadd.f32 %v929, %v998
    %v1000 = vpop.f32.mrb[0].mxu0
    %1001 = vdwg.mxu0
    %1002 = vmatprep.subr.mxu0 %v179
    %1003 = vmatpush1.xpose.msra.mxu0 %v178
    %1004 = vmatprep.subr.mxu0 %v200
    %1005 = vmatpush1.xpose.msra.mxu0 %v199
    %1006 = vmatprep.subr.mxu0 %v221
    %1007 = vmatpush1.xpose.msra.mxu0 %v220
    %1008 = vmatprep.subr.mxu0 %v242
    %1009 = vmatpush1.xpose.msra.mxu0 %v241
    %1010 = vmatprep.subr.mxu0 0.0
    %1011 = vmatpush1.xpose.msra.mxu0 0.0
    %1012 = vmatprep.subr.mxu0 0.0
    %1013 = vmatpush1.xpose.msra.mxu0 0.0
    %1014 = vmatprep.subr.mxu0 0.0
    %1015 = vmatpush1.xpose.msra.mxu0 0.0
    %1016 = vmatprep.subr.mxu0 0.0
    %1017 = vmatpush1.xpose.msra.mxu0 0.0
    %1018 = vmatprep.subr.mxu0 0.0
    %1019 = vmatpush1.xpose.msra.mxu0 0.0
    %1020 = vmatprep.subr.mxu0 0.0
    %1021 = vmatpush1.xpose.msra.mxu0 0.0
    %1022 = vmatprep.subr.mxu0 0.0
    %1023 = vmatpush1.xpose.msra.mxu0 0.0
    %1024 = vmatprep.subr.mxu0 0.0
    %1025 = vmatpush1.xpose.msra.mxu0 0.0
    %1026 = vmatprep.subr.mxu0 0.0
    %1027 = vmatpush1.xpose.msra.mxu0 0.0
    %1028 = vmatprep.subr.mxu0 0.0
    %1029 = vmatpush1.xpose.msra.mxu0 0.0
    %1030 = vmatprep.subr.mxu0 0.0
    %1031 = vmatpush1.xpose.msra.mxu0 0.0
    %1032 = vmatprep.subr.mxu0 0.0
    %1033 = vmatpush1.xpose.msra.mxu0 0.0
    %1034 = vmatprep.subr.mxu0 0.0
    %1035 = vmatpush1.xpose.msra.mxu0 0.0
    %1036 = vmatprep.subr.mxu0 0.0
    %1037 = vmatpush1.xpose.msra.mxu0 0.0
    %1038 = vmatprep.subr.mxu0 0.0
    %1039 = vmatpush1.xpose.msra.mxu0 0.0
    %1040 = vmatprep.subr.mxu0 0.0
    %1041 = vmatpush1.xpose.msra.mxu0 0.0
    %1042 = vmatprep.subr.mxu0 0.0
    %1043 = vmatpush1.xpose.msra.mxu0 0.0
    %1044 = vmatprep.subr.mxu0 0.0
    %1045 = vmatpush1.xpose.msra.mxu0 0.0
    %1046 = vmatprep.subr.mxu0 0.0
    %1047 = vmatpush1.xpose.msra.mxu0 0.0
    %1048 = vmatprep.subr.mxu0 0.0
    %1049 = vmatpush1.xpose.msra.mxu0 0.0
    %1050 = vmatprep.subr.mxu0 0.0
    %1051 = vmatpush1.xpose.msra.mxu0 0.0
    %1052 = vmatprep.subr.mxu0 0.0
    %1053 = vmatpush1.xpose.msra.mxu0 0.0
    %1054 = vmatprep.subr.mxu0 0.0
    %1055 = vmatpush1.xpose.msra.mxu0 0.0
    %1056 = vmatprep.subr.mxu0 0.0
    %1057 = vmatpush1.xpose.msra.mxu0 0.0
    %1058 = vmatprep.subr.mxu0 0.0
    %1059 = vmatpush1.xpose.msra.mxu0 0.0
    %1060 = vmatprep.subr.mxu0 0.0
    %1061 = vmatpush1.xpose.msra.mxu0 0.0
    %1062 = vmatprep.subr.mxu0 0.0
    %1063 = vmatpush1.xpose.msra.mxu0 0.0
    %1064 = vmatprep.subr.mxu0 0.0
    %1065 = vmatpush1.xpose.msra.mxu0 0.0
    %1066 = vmatprep.mubr.f32.mxu0 %v412
    %1067 = vmatmul.mubr.f32.gmra.mrb[0].mxu0 %v404
    %v1068 = vpop.f32.mrb[0].mxu0
    %v1069 = vadd.f32 %v999, %v1068
    %v1070 = vpop.f32.mrb[0].mxu0
    %1071 = vdwg.mxu0
    %1072 = vmatprep.subr.mxu0 %v181
    %1073 = vmatpush1.xpose.msra.mxu0 %v180
    %1074 = vmatprep.subr.mxu0 %v202
    %1075 = vmatpush1.xpose.msra.mxu0 %v201
    %1076 = vmatprep.subr.mxu0 %v223
    %1077 = vmatpush1.xpose.msra.mxu0 %v222
    %1078 = vmatprep.subr.mxu0 %v244
    %1079 = vmatpush1.xpose.msra.mxu0 %v243
    %1080 = vmatprep.subr.mxu0 0.0
    %1081 = vmatpush1.xpose.msra.mxu0 0.0
    %1082 = vmatprep.subr.mxu0 0.0
    %1083 = vmatpush1.xpose.msra.mxu0 0.0
    %1084 = vmatprep.subr.mxu0 0.0
    %1085 = vmatpush1.xpose.msra.mxu0 0.0
    %1086 = vmatprep.subr.mxu0 0.0
    %1087 = vmatpush1.xpose.msra.mxu0 0.0
    %1088 = vmatprep.subr.mxu0 0.0
    %1089 = vmatpush1.xpose.msra.mxu0 0.0
    %1090 = vmatprep.subr.mxu0 0.0
    %1091 = vmatpush1.xpose.msra.mxu0 0.0
    %1092 = vmatprep.subr.mxu0 0.0
    %1093 = vmatpush1.xpose.msra.mxu0 0.0
    %1094 = vmatprep.subr.mxu0 0.0
    %1095 = vmatpush1.xpose.msra.mxu0 0.0
    %1096 = vmatprep.subr.mxu0 0.0
    %1097 = vmatpush1.xpose.msra.mxu0 0.0
    %1098 = vmatprep.subr.mxu0 0.0
    %1099 = vmatpush1.xpose.msra.mxu0 0.0
    %1100 = vmatprep.subr.mxu0 0.0
    %1101 = vmatpush1.xpose.msra.mxu0 0.0
    %1102 = vmatprep.subr.mxu0 0.0
    %1103 = vmatpush1.xpose.msra.mxu0 0.0
    %1104 = vmatprep.subr.mxu0 0.0
    %1105 = vmatpush1.xpose.msra.mxu0 0.0
    %1106 = vmatprep.subr.mxu0 0.0
    %1107 = vmatpush1.xpose.msra.mxu0 0.0
    %1108 = vmatprep.subr.mxu0 0.0
    %1109 = vmatpush1.xpose.msra.mxu0 0.0
    %1110 = vmatprep.subr.mxu0 0.0
    %1111 = vmatpush1.xpose.msra.mxu0 0.0
    %1112 = vmatprep.subr.mxu0 0.0
    %1113 = vmatpush1.xpose.msra.mxu0 0.0
    %1114 = vmatprep.subr.mxu0 0.0
    %1115 = vmatpush1.xpose.msra.mxu0 0.0
    %1116 = vmatprep.subr.mxu0 0.0
    %1117 = vmatpush1.xpose.msra.mxu0 0.0
    %1118 = vmatprep.subr.mxu0 0.0
    %1119 = vmatpush1.xpose.msra.mxu0 0.0
    %1120 = vmatprep.subr.mxu0 0.0
    %1121 = vmatpush1.xpose.msra.mxu0 0.0
    %1122 = vmatprep.subr.mxu0 0.0
    %1123 = vmatpush1.xpose.msra.mxu0 0.0
    %1124 = vmatprep.subr.mxu0 0.0
    %1125 = vmatpush1.xpose.msra.mxu0 0.0
    %1126 = vmatprep.subr.mxu0 0.0
    %1127 = vmatpush1.xpose.msra.mxu0 0.0
    %1128 = vmatprep.subr.mxu0 0.0
    %1129 = vmatpush1.xpose.msra.mxu0 0.0
    %1130 = vmatprep.subr.mxu0 0.0
    %1131 = vmatpush1.xpose.msra.mxu0 0.0
    %1132 = vmatprep.subr.mxu0 0.0
    %1133 = vmatpush1.xpose.msra.mxu0 0.0
    %1134 = vmatprep.subr.mxu0 0.0
    %1135 = vmatpush1.xpose.msra.mxu0 0.0
    %1136 = vmatprep.mubr.f32.mxu0 %v413
    %1137 = vmatmul.mubr.f32.gmra.mrb[0].mxu0 %v411
    %v1138 = vpop.f32.mrb[0].mxu0
    %v1139 = vadd.f32 %v1069, %v1138
    %v1140 = vpop.f32.mrb[0].mxu0
    %1141 = vdwg.mxu0
    %1142 = vmatprep.subr.mxu0 0.0
    %1143 = vmatpush1.xpose.msra.mxu0 %v182
    %1144 = vmatprep.subr.mxu0 0.0
    %1145 = vmatpush1.xpose.msra.mxu0 %v203
    %1146 = vmatprep.subr.mxu0 0.0
    %1147 = vmatpush1.xpose.msra.mxu0 %v224
    %1148 = vmatprep.subr.mxu0 0.0
    %1149 = vmatpush1.xpose.msra.mxu0 %v245
    %1150 = vmatprep.subr.mxu0 0.0
    %1151 = vmatpush1.xpose.msra.mxu0 0.0
    %1152 = vmatprep.subr.mxu0 0.0
    %1153 = vmatpush1.xpose.msra.mxu0 0.0
    %1154 = vmatprep.subr.mxu0 0.0
    %1155 = vmatpush1.xpose.msra.mxu0 0.0
    %1156 = vmatprep.subr.mxu0 0.0
    %1157 = vmatpush1.xpose.msra.mxu0 0.0
    %1158 = vmatprep.subr.mxu0 0.0
    %1159 = vmatpush1.xpose.msra.mxu0 0.0
    %1160 = vmatprep.subr.mxu0 0.0
    %1161 = vmatpush1.xpose.msra.mxu0 0.0
    %1162 = vmatprep.subr.mxu0 0.0
    %1163 = vmatpush1.xpose.msra.mxu0 0.0
    %1164 = vmatprep.subr.mxu0 0.0
    %1165 = vmatpush1.xpose.msra.mxu0 0.0
    %1166 = vmatprep.subr.mxu0 0.0
    %1167 = vmatpush1.xpose.msra.mxu0 0.0
    %1168 = vmatprep.subr.mxu0 0.0
    %1169 = vmatpush1.xpose.msra.mxu0 0.0
    %1170 = vmatprep.subr.mxu0 0.0
    %1171 = vmatpush1.xpose.msra.mxu0 0.0
    %1172 = vmatprep.subr.mxu0 0.0
    %1173 = vmatpush1.xpose.msra.mxu0 0.0
    %1174 = vmatprep.subr.mxu0 0.0
    %1175 = vmatpush1.xpose.msra.mxu0 0.0
    %1176 = vmatprep.subr.mxu0 0.0
    %1177 = vmatpush1.xpose.msra.mxu0 0.0
    %1178 = vmatprep.subr.mxu0 0.0
    %1179 = vmatpush1.xpose.msra.mxu0 0.0
    %1180 = vmatprep.subr.mxu0 0.0
    %1181 = vmatpush1.xpose.msra.mxu0 0.0
    %1182 = vmatprep.subr.mxu0 0.0
    %1183 = vmatpush1.xpose.msra.mxu0 0.0
    %1184 = vmatprep.subr.mxu0 0.0
    %1185 = vmatpush1.xpose.msra.mxu0 0.0
    %1186 = vmatprep.subr.mxu0 0.0
    %1187 = vmatpush1.xpose.msra.mxu0 0.0
    %1188 = vmatprep.subr.mxu0 0.0
    %1189 = vmatpush1.xpose.msra.mxu0 0.0
    %1190 = vmatprep.subr.mxu0 0.0
    %1191 = vmatpush1.xpose.msra.mxu0 0.0
    %1192 = vmatprep.subr.mxu0 0.0
    %1193 = vmatpush1.xpose.msra.mxu0 0.0
    %1194 = vmatprep.subr.mxu0 0.0
    %1195 = vmatpush1.xpose.msra.mxu0 0.0
    %1196 = vmatprep.subr.mxu0 0.0
    %1197 = vmatpush1.xpose.msra.mxu0 0.0
    %1198 = vmatprep.subr.mxu0 0.0
    %1199 = vmatpush1.xpose.msra.mxu0 0.0
    %1200 = vmatprep.subr.mxu0 0.0
    %1201 = vmatpush1.xpose.msra.mxu0 0.0
    %1202 = vmatprep.subr.mxu0 0.0
    %1203 = vmatpush1.xpose.msra.mxu0 0.0
    %1204 = vmatprep.subr.mxu0 0.0
    %1205 = vmatpush1.xpose.msra.mxu0 0.0
    %1206 = vmatprep.mubr.f32.mxu0 0.0
    %1207 = vmatmul.mubr.f32.gmra.mrb[0].mxu0 %v420
    %v1208 = vpop.f32.mrb[0].mxu0
    %v1209 = vadd.f32 %v1139, %v1208
    %v1210 = vpop.f32.mrb[0].mxu0
    %1211 = vdwg.mxu0
    %v1212 = vld [vmem:[%s3 + $0x1] sm:$0x1]
    %v1213 = vlaneseq
    %v1214 = vshrl.u32 %v1213, 7
    %v1215 = vsub.s32 0, %v1214
    %v1216 = vrot.slane %v1212, %v1215
    %v1217 = vadd.f32 %v1209, %v1216
    %v1218 = vmax.f32 %v1217, 0.0
    %v1219 = vld [vmem:[%s6] sm:$0xff]
    %v1220 = vld [vmem:[%s6 + $0x8] sm:$0xff]
    %v1221 = vld [vmem:[%s6 + $0x10] sm:$0xff]
    %v1222 = vld [vmem:[%s6 + $0x18] sm:$0xff]
    %v1223 = vld [vmem:[%s7] sm:$0x1]
    %v1225 = vlaneseq
    %v1226 = vshrl.u32 %v1225, 7
    %v1227 = vsub.s32 0, %v1226
    %v1228 = vrot.slane %v1223, %v1227
    %v1231 = vsel %vm81, %v1218, 0
    %1233 = vmatprep.subr.mxu0 0.0
    %1234 = vmatpush1.msra.mxu0 %v1219
    %1235 = vmatprep.subr.mxu0 0.0
    %1236 = vmatpush1.msra.mxu0 %v1220
    %1237 = vmatprep.subr.mxu0 0.0
    %1238 = vmatpush1.msra.mxu0 %v1221
    %1239 = vmatprep.subr.mxu0 0.0
    %1240 = vmatpush1.msra.mxu0 %v1222
    %1241 = vmatprep.subr.mxu0 0.0
    %1242 = vmatpush1.msra.mxu0 0.0
    %1243 = vmatprep.subr.mxu0 0.0
    %1244 = vmatpush1.msra.mxu0 0.0
    %1245 = vmatprep.subr.mxu0 0.0
    %1246 = vmatpush1.msra.mxu0 0.0
    %1247 = vmatprep.subr.mxu0 0.0
    %1248 = vmatpush1.msra.mxu0 0.0
    %1249 = vmatprep.subr.mxu0 0.0
    %1250 = vmatpush1.msra.mxu0 0.0
    %1251 = vmatprep.subr.mxu0 0.0
    %1252 = vmatpush1.msra.mxu0 0.0
    %1253 = vmatprep.subr.mxu0 0.0
    %1254 = vmatpush1.msra.mxu0 0.0
    %1255 = vmatprep.subr.mxu0 0.0
    %1256 = vmatpush1.msra.mxu0 0.0
    %1257 = vmatprep.subr.mxu0 0.0
    %1258 = vmatpush1.msra.mxu0 0.0
    %1259 = vmatprep.subr.mxu0 0.0
    %1260 = vmatpush1.msra.mxu0 0.0
    %1261 = vmatprep.subr.mxu0 0.0
    %1262 = vmatpush1.msra.mxu0 0.0
    %1263 = vmatprep.subr.mxu0 0.0
    %1264 = vmatpush1.msra.mxu0 0.0
    %1265 = vmatprep.subr.mxu0 0.0
    %1266 = vmatpush1.msra.mxu0 0.0
    %1267 = vmatprep.subr.mxu0 0.0
    %1268 = vmatpush1.msra.mxu0 0.0
    %1269 = vmatprep.subr.mxu0 0.0
    %1270 = vmatpush1.msra.mxu0 0.0
    %1271 = vmatprep.subr.mxu0 0.0
    %1272 = vmatpush1.msra.mxu0 0.0
    %1273 = vmatprep.subr.mxu0 0.0
    %1274 = vmatpush1.msra.mxu0 0.0
    %1275 = vmatprep.subr.mxu0 0.0
    %1276 = vmatpush1.msra.mxu0 0.0
    %1277 = vmatprep.subr.mxu0 0.0
    %1278 = vmatpush1.msra.mxu0 0.0
    %1279 = vmatprep.subr.mxu0 0.0
    %1280 = vmatpush1.msra.mxu0 0.0
    %1281 = vmatprep.subr.mxu0 0.0
    %1282 = vmatpush1.msra.mxu0 0.0
    %1283 = vmatprep.subr.mxu0 0.0
    %1284 = vmatpush1.msra.mxu0 0.0
    %1285 = vmatprep.subr.mxu0 0.0
    %1286 = vmatpush1.msra.mxu0 0.0
    %1287 = vmatprep.subr.mxu0 0.0
    %1288 = vmatpush1.msra.mxu0 0.0
    %1289 = vmatprep.subr.mxu0 0.0
    %1290 = vmatpush1.msra.mxu0 0.0
    %1291 = vmatprep.subr.mxu0 0.0
    %1292 = vmatpush1.msra.mxu0 0.0
    %1293 = vmatprep.subr.mxu0 0.0
    %1294 = vmatpush1.msra.mxu0 0.0
    %1295 = vmatprep.subr.mxu0 0.0
    %1296 = vmatpush1.msra.mxu0 0.0
    %1297 = vmatprep.mubr.f32.mxu0 0.0
    %1298 = vmatmul.mubr.f32.gmra.mrb[0].mxu0 %v1231
    %v1299 = vpop.f32.mrb[0].mxu0
    %v1300 = vadd.f32 %v1228, %v1299
    %v1301 = vpop.f32.mrb[0].mxu0
    %1302 = vdwg.mxu0
    %vm1303 = vcmask 91136
    %1304 = vst.msk [vmem:[#allocation8] sm:$0x3] %vm1303, %v1300
    // Predicated region
    $region46: #{tpu_custom_call.1} parent=1 // pred_check
      _
    $region47: #{tpu_custom_call.1} parent=1 // pred_check_branch
      %1306 = sbr.rel (0) target = $region49
    $region48: #{tpu_custom_call.1} parent=1 // pred_region
      %s1308 = ssub.s32 32, 32
      %1309 = vsyncadd [#allocation4], %s1308
      %s1311 = sshll.u32 [#allocation8], 4
      %s1312 = int_to_ptr.vmem [resolvable:$true] %s1311
      %1314 = dma.vmem_to_hbm [thread:$0]  %s1312, 32, %s8, [#allocation4]
    $region49: #{tpu_custom_call.1} parent=1 // pred_fallthru
      _
    // Predicated region
    $region50: #{tpu_custom_call.1} parent=1 // pred_check
      _
    $region51: #{tpu_custom_call.1} parent=1 // pred_check_branch
      %1316 = sbr.rel (0) target = $region53
    $region52: #{tpu_custom_call.1} parent=1 // pred_region
      %1317 = dma.done [#allocation4], 32
    $region53: #{tpu_custom_call.1} parent=1 // pred_fallthru
      _
    %1318 = vsyncpa [#allocation3], 1
    %1319 = vsyncpa [#allocation6], 1
    %1320 = vsyncpa [#allocation4], 1

</llo_original>
